<compile_context>
chip_gen: v7x
topology: tpu7x:2x2x1
jax: 0.10.0
libtpu: 0.0.40
codegen_flags: <defaults>
</compile_context>

<pallas_src>
import functools

import jax
import jax.numpy as jnp
from jax.experimental import pallas as pl
from jax.experimental.pallas import tpu as pltpu

HIDDEN = 64        # true hidden width of the PyTorch module
LANE = 128         # TPU lane width (fused proj|gate result width)


def _round_up(x, m):
    return ((x + m - 1) // m) * m


def ffnn_kernel(obs_ref,
                wpg_ref, bpg_ref,     # fused EAttention proj|gate: (in, 128) bf16
                w1_ref, b1_ref,       # layer1: (64, 64) bf16
                w2_ref, b2_ref,       # layer2: (64, 64) bf16
                w3_ref, b3_ref,       # layer3: (64, out_dim) bf16
                out_ref):
    # bf16 MXU operands, f32 accumulation + f32 epilogue.
    x = obs_ref[...].astype(jnp.bfloat16)                       # (TB, in_dim)

    # ---- EAttention feature extractor (fused proj+gate matmul) ----
    pg = jnp.dot(x, wpg_ref[...],
                 preferred_element_type=jnp.float32) + bpg_ref[...]   # (TB, 128) f32
    proj = pg[:, :HIDDEN]                                       # (TB, 64)
    g = pg[:, HIDDEN:]                                          # (TB, 64)
    # numerically-stable softmax over the 64 gate lanes (f32 on VPU/EUP/XLU)
    g = g - jnp.max(g, axis=-1, keepdims=True)
    eg = jnp.exp(g)
    gate = eg * pl.reciprocal(jnp.sum(eg, axis=-1, keepdims=True), approx=True)
    features = (proj * gate).astype(jnp.bfloat16)               # (TB, 64)

    # ---- MLP head (true 64-wide intermediates, no K zero-padding) ----
    a1 = jnp.maximum(
        jnp.dot(features, w1_ref[...],
                preferred_element_type=jnp.float32) + b1_ref[...], 0.0)   # (TB, 64) f32
    a2 = jnp.maximum(
        jnp.dot(a1.astype(jnp.bfloat16), w2_ref[...],
                preferred_element_type=jnp.float32) + b2_ref[...], 0.0)   # (TB, 64) f32
    out = jnp.dot(a2.astype(jnp.bfloat16), w3_ref[...],
                  preferred_element_type=jnp.float32) + b3_ref[...]       # (TB, out)
    out_ref[...] = out.astype(out_ref.dtype)


@functools.partial(jax.jit, static_argnames=("out_dim", "tb"))
def feed_forward_nn(obs, packed, *, out_dim, tb=4096):
    """Forward pass.  obs: (B, in_dim) f32.  Returns (B, out_dim) f32."""
    B, in_dim = obs.shape

    # Batch tile: multiple of 8 sublanes, capped at (8-padded) batch size.
    b8 = _round_up(B, 8)
    tb = min(tb, b8)
    # v7x megacore: make sure the batch grid has >= 2 steps whenever the batch
    # allows it, so ("parallel",) can shard steps across both TensorCores.
    if b8 >= 16 and pl.cdiv(b8, tb) < 2:
        tb = _round_up(pl.cdiv(b8, 2), 8)

    Bp = _round_up(B, tb)
    if Bp != B:
        obs = jnp.pad(obs, ((0, Bp - B), (0, 0)))
    grid = (pl.cdiv(Bp, tb),)

    def resident(shape):
        # weights/biases: same block every grid step -> stay VMEM-resident
        return pl.BlockSpec(shape, lambda i: (0, 0))

    out_padded = pl.pallas_call(
        ffnn_kernel,
        out_shape=jax.ShapeDtypeStruct((Bp, out_dim), jnp.float32),
        grid=grid,
        in_specs=[
            pl.BlockSpec((tb, in_dim), lambda i: (i, 0)),   # obs tile streams
            resident(packed["wpg"].shape), resident(packed["bpg"].shape),
            resident(packed["w1"].shape), resident(packed["b1"].shape),
            resident(packed["w2"].shape), resident(packed["b2"].shape),
            resident(packed["w3"].shape), resident(packed["b3"].shape),
        ],
        # narrow (tb, out_dim) output block: avoids 16x padded f32 writeback
        # plus the extra HBM pass the old wrapper [:B, :128] slice cost.
        out_specs=pl.BlockSpec((tb, out_dim), lambda i: (i, 0)),
        compiler_params=pltpu.CompilerParams(
            dimension_semantics=("parallel",),        # 2 TCs on v7x
            vmem_limit_bytes=48 * 1024 * 1024,        # < 64 MiB physical on v7x,
        ),                                            # ample on v5e/v6e
    )(obs,
      packed["wpg"], packed["bpg"],
      packed["w1"], packed["b1"],
      packed["w2"], packed["b2"],
      packed["w3"], packed["b3"])

    return out_padded[:B, :]


# ---------------------------------------------------------------------------
# Parameter construction (shapes mirror the PyTorch module) + packing
# ---------------------------------------------------------------------------
def init_raw_params(key, in_dim, out_dim, hidden=HIDDEN):
    """Deterministic synthetic init, (in, out) weight layout (pre-transposed)."""
    ks = jax.random.split(key, 10)

    def lin(kw, kb, fan_in, fan_out):
        scale = 1.0 / jnp.sqrt(jnp.float32(fan_in))
        w = jax.random.uniform(kw, (fan_in, fan_out), jnp.float32, -scale, scale)
        b = jax.random.uniform(kb, (fan_out,), jnp.float32, -scale, scale)
        return w, b

    wp, bp = lin(ks[0], ks[1], in_dim, hidden)    # EAttention projection
    wg, bg = lin(ks[2], ks[3], in_dim, hidden)    # EAttention gate
    w1, b1 = lin(ks[4], ks[5], hidden, hidden)    # layer1
    w2, b2 = lin(ks[6], ks[7], hidden, hidden)    # layer2
    w3, b3 = lin(ks[8], ks[9], hidden, out_dim)   # layer3
    return dict(wp=wp, bp=bp, wg=wg, bg=bg,
                w1=w1, b1=b1, w2=w2, b2=b2, w3=w3, b3=b3)


def pack_params(raw):
    """Fuse proj|gate, cast matmul weights to bf16, keep biases f32."""
    wpg = jnp.concatenate([raw["wp"], raw["wg"]], axis=1).astype(jnp.bfloat16)
    bpg = jnp.concatenate([raw["bp"], raw["bg"]])[None, :]        # (1, 128) f32
    return dict(
        wpg=wpg, bpg=bpg,
        w1=raw["w1"].astype(jnp.bfloat16), b1=raw["b1"][None, :],  # (64,64)/(1,64)
        w2=raw["w2"].astype(jnp.bfloat16), b2=raw["b2"][None, :],
        w3=raw["w3"].astype(jnp.bfloat16), b3=raw["b3"][None, :],  # (64,out)/(1,out)
    )


def reference_forward(obs, raw):
    """Pure-JAX f32 reference of the same forward pass (for correctness check)."""
    proj = obs @ raw["wp"] + raw["bp"]
    gate = jax.nn.softmax(obs @ raw["wg"] + raw["bg"], axis=-1)
    feats = proj * gate
    a1 = jax.nn.relu(feats @ raw["w1"] + raw["b1"])
    a2 = jax.nn.relu(a1 @ raw["w2"] + raw["b2"])
    return a2 @ raw["w3"] + raw["b3"]


if __name__ == "__main__":
    B, in_dim, out_dim = 8, 32, 8

    key = jax.random.PRNGKey(0)
    k_obs, k_par = jax.random.split(key)
    obs = jax.random.normal(k_obs, (B, in_dim), jnp.float32)
    raw = init_raw_params(k_par, in_dim, out_dim)
    packed = pack_params(raw)

    out = feed_forward_nn(obs, packed, out_dim=out_dim)
    jax.block_until_ready(out)

    ref = reference_forward(obs, raw)

    assert out.shape == (B, out_dim)
    assert bool(jnp.all(jnp.isfinite(out)))
    # loose tolerance: bf16 matmul operands + approx reciprocal in the softmax
    assert bool(jnp.allclose(out, ref, rtol=2e-2, atol=2e-2)), (
        float(jnp.max(jnp.abs(out - ref))))
    print("KERNEL_OK")
</pallas_src>

<mosaic_0001>
module attributes {stable_mosaic.version = 11 : i64} {
  func.func @ffnn_kernel(%arg0: i32, %arg1: memref<8x32xf32, #tpu.memory_space<vmem>>, %arg2: memref<32x128xbf16, #tpu.memory_space<vmem>>, %arg3: memref<1x128xf32, #tpu.memory_space<vmem>>, %arg4: memref<64x64xbf16, #tpu.memory_space<vmem>>, %arg5: memref<1x64xf32, #tpu.memory_space<vmem>>, %arg6: memref<64x64xbf16, #tpu.memory_space<vmem>>, %arg7: memref<1x64xf32, #tpu.memory_space<vmem>>, %arg8: memref<64x8xbf16, #tpu.memory_space<vmem>>, %arg9: memref<1x8xf32, #tpu.memory_space<vmem>>, %arg10: memref<8x8xf32, #tpu.memory_space<vmem>>) attributes {dimension_semantics = [#tpu.dimension_semantics<parallel>], iteration_bounds = array<i64: 1>, scalar_prefetch = 0 : i64, scratch_operands = 0 : i64, tpu.core_type = #tpu.core_type<tc>, window_params = [{transform_indices = @transform_0, window_bounds = array<i64: 8, 32>}, {pipeline_mode = #tpu.pipeline_mode<synchronous>, transform_indices = @transform_1, window_bounds = array<i64: 32, 128>}, {pipeline_mode = #tpu.pipeline_mode<synchronous>, transform_indices = @transform_2, window_bounds = array<i64: 1, 128>}, {pipeline_mode = #tpu.pipeline_mode<synchronous>, transform_indices = @transform_3, window_bounds = array<i64: 64, 64>}, {pipeline_mode = #tpu.pipeline_mode<synchronous>, transform_indices = @transform_4, window_bounds = array<i64: 1, 64>}, {pipeline_mode = #tpu.pipeline_mode<synchronous>, transform_indices = @transform_5, window_bounds = array<i64: 64, 64>}, {pipeline_mode = #tpu.pipeline_mode<synchronous>, transform_indices = @transform_6, window_bounds = array<i64: 1, 64>}, {pipeline_mode = #tpu.pipeline_mode<synchronous>, transform_indices = @transform_7, window_bounds = array<i64: 64, 8>}, {pipeline_mode = #tpu.pipeline_mode<synchronous>, transform_indices = @transform_8, window_bounds = array<i64: 1, 8>}, {transform_indices = @transform_9, window_bounds = array<i64: 8, 8>}]} {
    %c0 = arith.constant 0 : index
    %c0_0 = arith.constant 0 : index
    %0 = vector.load %arg1[%c0, %c0_0] : memref<8x32xf32, #tpu.memory_space<vmem>>, vector<8x32xf32>
    %1 = arith.truncf %0 : vector<8x32xf32> to vector<8x32xbf16>
    %c0_1 = arith.constant 0 : index
    %c0_2 = arith.constant 0 : index
    %2 = vector.load %arg2[%c0_1, %c0_2] : memref<32x128xbf16, #tpu.memory_space<vmem>>, vector<32x128xbf16>
    %cst = arith.constant dense<0.000000e+00> : vector<8x128xf32>
    %3 = tpu.matmul %1, %2, %cst {dimension_numbers = #tpu.dot_dimension_numbers<[1], [0], [0], [1], [0, 0, 1, 1], [], []>} : vector<8x32xbf16>, vector<32x128xbf16>, vector<8x128xf32> -> vector<8x128xf32>
    %c0_3 = arith.constant 0 : index
    %c0_4 = arith.constant 0 : index
    %4 = vector.load %arg3[%c0_3, %c0_4] : memref<1x128xf32, #tpu.memory_space<vmem>>, vector<1x128xf32>
    %5 = vector.broadcast %4 : vector<1x128xf32> to vector<8x128xf32>
    %6 = arith.addf %3, %5 : vector<8x128xf32>
    %7 = vector.extract_strided_slice %6 {offsets = [0, 0], sizes = [8, 64], strides = [1, 1]} : vector<8x128xf32> to vector<8x64xf32>
    %8 = vector.extract_strided_slice %6 {offsets = [0, 64], sizes = [8, 64], strides = [1, 1]} : vector<8x128xf32> to vector<8x64xf32>
    %cst_5 = arith.constant dense<0xFF800000> : vector<8xf32>
    %9 = vector.multi_reduction <maximumf>, %8, %cst_5 [1] : vector<8x64xf32> to vector<8xf32>
    %10 = vector.shape_cast %9 : vector<8xf32> to vector<8x1xf32>
    %11 = vector.broadcast %10 : vector<8x1xf32> to vector<8x64xf32>
    %12 = arith.subf %8, %11 : vector<8x64xf32>
    %13 = math.exp %12 : vector<8x64xf32>
    %cst_6 = arith.constant dense<0.000000e+00> : vector<8xf32>
    %14 = vector.multi_reduction <add>, %13, %cst_6 [1] : vector<8x64xf32> to vector<8xf32>
    %15 = vector.shape_cast %14 : vector<8xf32> to vector<8x1xf32>
    %16 = tpu.reciprocal %15 {approx = true} : vector<8x1xf32> -> vector<8x1xf32>
    %17 = vector.broadcast %16 : vector<8x1xf32> to vector<8x64xf32>
    %18 = arith.mulf %13, %17 : vector<8x64xf32>
    %19 = arith.mulf %7, %18 : vector<8x64xf32>
    %20 = arith.truncf %19 : vector<8x64xf32> to vector<8x64xbf16>
    %c0_7 = arith.constant 0 : index
    %c0_8 = arith.constant 0 : index
    %21 = vector.load %arg4[%c0_7, %c0_8] : memref<64x64xbf16, #tpu.memory_space<vmem>>, vector<64x64xbf16>
    %cst_9 = arith.constant dense<0.000000e+00> : vector<8x64xf32>
    %22 = tpu.matmul %20, %21, %cst_9 {dimension_numbers = #tpu.dot_dimension_numbers<[1], [0], [0], [1], [0, 0, 1, 1], [], []>} : vector<8x64xbf16>, vector<64x64xbf16>, vector<8x64xf32> -> vector<8x64xf32>
    %c0_10 = arith.constant 0 : index
    %c0_11 = arith.constant 0 : index
    %23 = vector.load %arg5[%c0_10, %c0_11] : memref<1x64xf32, #tpu.memory_space<vmem>>, vector<1x64xf32>
    %24 = vector.broadcast %23 : vector<1x64xf32> to vector<8x64xf32>
    %25 = arith.addf %22, %24 : vector<8x64xf32>
    %cst_12 = arith.constant 0.000000e+00 : f32
    %26 = vector.broadcast %cst_12 : f32 to vector<8x64xf32>
    %27 = arith.maximumf %25, %26 : vector<8x64xf32>
    %28 = arith.truncf %27 : vector<8x64xf32> to vector<8x64xbf16>
    %c0_13 = arith.constant 0 : index
    %c0_14 = arith.constant 0 : index
    %29 = vector.load %arg6[%c0_13, %c0_14] : memref<64x64xbf16, #tpu.memory_space<vmem>>, vector<64x64xbf16>
    %cst_15 = arith.constant dense<0.000000e+00> : vector<8x64xf32>
    %30 = tpu.matmul %28, %29, %cst_15 {dimension_numbers = #tpu.dot_dimension_numbers<[1], [0], [0], [1], [0, 0, 1, 1], [], []>} : vector<8x64xbf16>, vector<64x64xbf16>, vector<8x64xf32> -> vector<8x64xf32>
    %c0_16 = arith.constant 0 : index
    %c0_17 = arith.constant 0 : index
    %31 = vector.load %arg7[%c0_16, %c0_17] : memref<1x64xf32, #tpu.memory_space<vmem>>, vector<1x64xf32>
    %32 = vector.broadcast %31 : vector<1x64xf32> to vector<8x64xf32>
    %33 = arith.addf %30, %32 : vector<8x64xf32>
    %cst_18 = arith.constant 0.000000e+00 : f32
    %34 = vector.broadcast %cst_18 : f32 to vector<8x64xf32>
    %35 = arith.maximumf %33, %34 : vector<8x64xf32>
    %36 = arith.truncf %35 : vector<8x64xf32> to vector<8x64xbf16>
    %c0_19 = arith.constant 0 : index
    %c0_20 = arith.constant 0 : index
    %37 = vector.load %arg8[%c0_19, %c0_20] : memref<64x8xbf16, #tpu.memory_space<vmem>>, vector<64x8xbf16>
    %cst_21 = arith.constant dense<0.000000e+00> : vector<8x8xf32>
    %38 = tpu.matmul %36, %37, %cst_21 {dimension_numbers = #tpu.dot_dimension_numbers<[1], [0], [0], [1], [0, 0, 1, 1], [], []>} : vector<8x64xbf16>, vector<64x8xbf16>, vector<8x8xf32> -> vector<8x8xf32>
    %c0_22 = arith.constant 0 : index
    %c0_23 = arith.constant 0 : index
    %39 = vector.load %arg9[%c0_22, %c0_23] : memref<1x8xf32, #tpu.memory_space<vmem>>, vector<1x8xf32>
    %40 = vector.broadcast %39 : vector<1x8xf32> to vector<8x8xf32>
    %41 = arith.addf %38, %40 : vector<8x8xf32>
    %c0_24 = arith.constant 0 : index
    %c0_25 = arith.constant 0 : index
    %42 = vector.load %arg10[%c0_24, %c0_25] : memref<8x8xf32, #tpu.memory_space<vmem>>, vector<8x8xf32>
    tpu.vector_store %arg10[%c0_24, %c0_25], %41 {strides = array<i32>} : memref<8x8xf32, #tpu.memory_space<vmem>>, vector<8x8xf32>,
    return
  }
  func.func @transform_0(%arg0: i32) -> (i32, i32) {
    %c0_i32 = arith.constant 0 : i32
    %c0_i32_0 = arith.constant 0 : i32
    return %arg0, %c0_i32 : i32, i32
  }
  func.func @transform_1(%arg0: i32) -> (i32, i32) {
    %c0_i32 = arith.constant 0 : i32
    %c0_i32_0 = arith.constant 0 : i32
    %c0_i32_1 = arith.constant 0 : i32
    return %c0_i32, %c0_i32_0 : i32, i32
  }
  func.func @transform_2(%arg0: i32) -> (i32, i32) {
    %c0_i32 = arith.constant 0 : i32
    %c0_i32_0 = arith.constant 0 : i32
    %c0_i32_1 = arith.constant 0 : i32
    return %c0_i32, %c0_i32_0 : i32, i32
  }
  func.func @transform_3(%arg0: i32) -> (i32, i32) {
    %c0_i32 = arith.constant 0 : i32
    %c0_i32_0 = arith.constant 0 : i32
    %c0_i32_1 = arith.constant 0 : i32
    return %c0_i32, %c0_i32_0 : i32, i32
  }
  func.func @transform_4(%arg0: i32) -> (i32, i32) {
    %c0_i32 = arith.constant 0 : i32
    %c0_i32_0 = arith.constant 0 : i32
    %c0_i32_1 = arith.constant 0 : i32
    return %c0_i32, %c0_i32_0 : i32, i32
  }
  func.func @transform_5(%arg0: i32) -> (i32, i32) {
    %c0_i32 = arith.constant 0 : i32
    %c0_i32_0 = arith.constant 0 : i32
    %c0_i32_1 = arith.constant 0 : i32
    return %c0_i32, %c0_i32_0 : i32, i32
  }
  func.func @transform_6(%arg0: i32) -> (i32, i32) {
    %c0_i32 = arith.constant 0 : i32
    %c0_i32_0 = arith.constant 0 : i32
    %c0_i32_1 = arith.constant 0 : i32
    return %c0_i32, %c0_i32_0 : i32, i32
  }
  func.func @transform_7(%arg0: i32) -> (i32, i32) {
    %c0_i32 = arith.constant 0 : i32
    %c0_i32_0 = arith.constant 0 : i32
    %c0_i32_1 = arith.constant 0 : i32
    return %c0_i32, %c0_i32_0 : i32, i32
  }
  func.func @transform_8(%arg0: i32) -> (i32, i32) {
    %c0_i32 = arith.constant 0 : i32
    %c0_i32_0 = arith.constant 0 : i32
    %c0_i32_1 = arith.constant 0 : i32
    return %c0_i32, %c0_i32_0 : i32, i32
  }
  func.func @transform_9(%arg0: i32) -> (i32, i32) {
    %c0_i32 = arith.constant 0 : i32
    %c0_i32_0 = arith.constant 0 : i32
    return %arg0, %c0_i32 : i32, i32
  }
}

</mosaic_0001>

<llo_original>
// kernel: feed_forward_nn.1
$region0: #{feed_forward_nn.1}
  #allocation0 [shape = 'u32[]', space=smem, size = 0x4, offset = 0x4, fixed_abs, tag = 'smem constant byte address 0x4 - core index']
  #allocation1 [shape = 'u32[144,128]{1,0:T(1,128)}', space=vmem, size = 0x12000, scoped, tag = 'internal scratch']
  %s0 = inlined_call_operand.hbm [shape: f32[8,32], index: 0, kind: input, shape index: {}]
  %s1 = inlined_call_operand.vmem [shape: bf16[32,128], index: 1, kind: input, shape index: {}]
  %s2 = inlined_call_operand.vmem [shape: f32[1,128], index: 2, kind: input, shape index: {}]
  %s3 = inlined_call_operand.vmem [shape: bf16[64,64], index: 3, kind: input, shape index: {}]
  %s4 = inlined_call_operand.vmem [shape: f32[1,64], index: 4, kind: input, shape index: {}]
  %s5 = inlined_call_operand.hbm [shape: bf16[64,64], index: 5, kind: input, shape index: {}]
  %s6 = inlined_call_operand.vmem [shape: f32[1,64], index: 6, kind: input, shape index: {}]
  %s7 = inlined_call_operand.vmem [shape: bf16[64,8], index: 7, kind: input, shape index: {}]
  %s8 = inlined_call_operand.vmem [shape: f32[1,8], index: 8, kind: input, shape index: {}]
  %s9 = inlined_call_operand.hbm [shape: f32[8,8], index: 9, kind: output, shape index: {}]
  %s10 = sld [smem:[#allocation0]]
  $region54: #{feed_forward_nn.1} parent=0
    _
  %s12 = ssub.s32 1, %s10
  %s13 = scalar_select 0, %s12, %s10
  $region1: #{feed_forward_nn.1} parent=0
    #allocation2 [shape = 'u8[4096]{0}', space=vmem, size = 0x1000, scoped, tag = 'input window, operand 0, single buffered']
    #allocation3 [shape = 's32[1]{0}', space=sflag, size = 0x4, scoped, tag = 'scoped memory for feed_forward_nn.1']
    #allocation4 [shape = 's32[1]{0}', space=sflag, size = 0x4, scoped, tag = 'scoped memory for feed_forward_nn.1']
    #allocation5 [shape = 'u8[16384]{0}', space=vmem, size = 0x4000, scoped, tag = 'input window, operand 5, single buffered']
    #allocation6 [shape = 's32[1]{0}', space=sflag, size = 0x4, scoped, tag = 'scoped memory for feed_forward_nn.1']
    #allocation7 [shape = 'u8[4096]{0}', space=vmem, size = 0x1000, scoped, tag = 'output window, operand 0, single buffered']
    %14 = vsyncpa [#allocation3], 0
    %15 = vsyncpa [#allocation6], 0
    %16 = vsyncpa [#allocation4], 0
    // Predicated region
    $region2: #{feed_forward_nn.1} parent=1 // pred_check
      _
    $region3: #{feed_forward_nn.1} parent=1 // pred_check_branch
      %18 = sbr.rel (0) target = $region5
    $region4: #{feed_forward_nn.1} parent=1 // pred_region
      %s20 = ssub.s32 128, 128
      %21 = vsyncadd [#allocation3], %s20
      %s23 = sshll.u32 [#allocation2], 4
      %s24 = int_to_ptr.vmem [resolvable:$true] %s23
      %26 = dma.hbm_to_vmem [thread:$0]  %s0, 128, %s24, [#allocation3]
    $region5: #{feed_forward_nn.1} parent=1 // pred_fallthru
      _
    // Predicated region
    $region6: #{feed_forward_nn.1} parent=1 // pred_check
      _
    $region7: #{feed_forward_nn.1} parent=1 // pred_check_branch
      %28 = sbr.rel (0) target = $region9
    $region8: #{feed_forward_nn.1} parent=1 // pred_region
      _
    $region9: #{feed_forward_nn.1} parent=1 // pred_fallthru
      _
    // Predicated region
    $region10: #{feed_forward_nn.1} parent=1 // pred_check
      _
    $region11: #{feed_forward_nn.1} parent=1 // pred_check_branch
      %30 = sbr.rel (0) target = $region13
    $region12: #{feed_forward_nn.1} parent=1 // pred_region
      _
    $region13: #{feed_forward_nn.1} parent=1 // pred_fallthru
      _
    // Predicated region
    $region14: #{feed_forward_nn.1} parent=1 // pred_check
      _
    $region15: #{feed_forward_nn.1} parent=1 // pred_check_branch
      %32 = sbr.rel (0) target = $region17
    $region16: #{feed_forward_nn.1} parent=1 // pred_region
      _
    $region17: #{feed_forward_nn.1} parent=1 // pred_fallthru
      _
    // Predicated region
    $region18: #{feed_forward_nn.1} parent=1 // pred_check
      _
    $region19: #{feed_forward_nn.1} parent=1 // pred_check_branch
      %34 = sbr.rel (0) target = $region21
    $region20: #{feed_forward_nn.1} parent=1 // pred_region
      _
    $region21: #{feed_forward_nn.1} parent=1 // pred_fallthru
      _
    // Predicated region
    $region22: #{feed_forward_nn.1} parent=1 // pred_check
      _
    $region23: #{feed_forward_nn.1} parent=1 // pred_check_branch
      %36 = sbr.rel (0) target = $region25
    $region24: #{feed_forward_nn.1} parent=1 // pred_region
      %s38 = ssub.s32 512, 512
      %39 = vsyncadd [#allocation6], %s38
      %s40 = sshll.u32 [#allocation5], 4
      %s41 = int_to_ptr.vmem [resolvable:$true] %s40
      %46 = dma.hbm_to_vmem [thread:$0]  %s5, 512, %s41, [#allocation6], 64, 64, 4
    $region25: #{feed_forward_nn.1} parent=1 // pred_fallthru
      _
    // Predicated region
    $region26: #{feed_forward_nn.1} parent=1 // pred_check
      _
    $region27: #{feed_forward_nn.1} parent=1 // pred_check_branch
      %48 = sbr.rel (0) target = $region29
    $region28: #{feed_forward_nn.1} parent=1 // pred_region
      _
    $region29: #{feed_forward_nn.1} parent=1 // pred_fallthru
      _
    // Predicated region
    $region30: #{feed_forward_nn.1} parent=1 // pred_check
      _
    $region31: #{feed_forward_nn.1} parent=1 // pred_check_branch
      %50 = sbr.rel (0) target = $region33
    $region32: #{feed_forward_nn.1} parent=1 // pred_region
      _
    $region33: #{feed_forward_nn.1} parent=1 // pred_fallthru
      _
    // Predicated region
    $region34: #{feed_forward_nn.1} parent=1 // pred_check
      _
    $region35: #{feed_forward_nn.1} parent=1 // pred_check_branch
      %52 = sbr.rel (0) target = $region37
    $region36: #{feed_forward_nn.1} parent=1 // pred_region
      _
    $region37: #{feed_forward_nn.1} parent=1 // pred_fallthru
      _
    // Predicated region
    $region38: #{feed_forward_nn.1} parent=1 // pred_check
      _
    $region39: #{feed_forward_nn.1} parent=1 // pred_check_branch
      %54 = sbr.rel (0) target = $region41
    $region40: #{feed_forward_nn.1} parent=1 // pred_region
      %55 = dma.done [#allocation3], 128
    $region41: #{feed_forward_nn.1} parent=1 // pred_fallthru
      _
    // Predicated region
    $region42: #{feed_forward_nn.1} parent=1 // pred_check
      _
    $region43: #{feed_forward_nn.1} parent=1 // pred_check_branch
      %57 = sbr.rel (0) target = $region45
    $region44: #{feed_forward_nn.1} parent=1 // pred_region
      %58 = dma.done [#allocation6], 512
    $region45: #{feed_forward_nn.1} parent=1 // pred_fallthru
      _
    %v60 = vld [vmem:[#allocation2] sm:$0xff]
    %v61 = vpack.c.bf16 %v60, %v60
    %v62 = vld [vmem:[%s1] sm:$0xf]
    %v63 = vld [vmem:[%s1 + $0x4] sm:$0xf]
    %v64 = vld [vmem:[%s1 + $0x8] sm:$0xf]
    %v65 = vld [vmem:[%s1 + $0xc] sm:$0xf]
    %v66 = vld [vmem:[%s2] sm:$0x1]
    %v68 = vlaneseq
    %v69 = vshrl.u32 %v68, 7
    %v70 = vsub.s32 0, %v69
    %v71 = vrot.slane %v66, %v70
    %v77 = vunpack.c.l.b16 %v62
    %v78 = vunpack.c.l.b16 %v63
    %v79 = vunpack.c.l.b16 %v64
    %v80 = vunpack.c.l.b16 %v65
    %v81 = vpack.c.b16 %v78, %v77
    %v82 = vpack.c.b16 %v80, %v79
    %vm85 = vcmask 261120
    %v87 = vsel %vm85, %v61, 0
    %89 = vmatprep.subr.bf16.mxu0 0
    %90 = vmatpush1.bf16.msra.mxu0 %v81
    %91 = vmatprep.subr.bf16.mxu0 0
    %92 = vmatpush1.bf16.msra.mxu0 %v82
    %93 = vmatprep.subr.bf16.mxu0 0
    %94 = vmatpush1.bf16.msra.mxu0 0
    %95 = vmatprep.subr.bf16.mxu0 0
    %96 = vmatpush1.bf16.msra.mxu0 0
    %97 = vmatprep.subr.bf16.mxu0 0
    %98 = vmatpush1.bf16.msra.mxu0 0
    %99 = vmatprep.subr.bf16.mxu0 0
    %100 = vmatpush1.bf16.msra.mxu0 0
    %101 = vmatprep.subr.bf16.mxu0 0
    %102 = vmatpush1.bf16.msra.mxu0 0
    %103 = vmatprep.subr.bf16.mxu0 0
    %104 = vmatpush1.bf16.msra.mxu0 0
    %105 = vmatprep.subr.bf16.mxu0 0
    %106 = vmatpush1.bf16.msra.mxu0 0
    %107 = vmatprep.subr.bf16.mxu0 0
    %108 = vmatpush1.bf16.msra.mxu0 0
    %109 = vmatprep.subr.bf16.mxu0 0
    %110 = vmatpush1.bf16.msra.mxu0 0
    %111 = vmatprep.subr.bf16.mxu0 0
    %112 = vmatpush1.bf16.msra.mxu0 0
    %113 = vmatprep.subr.bf16.mxu0 0
    %114 = vmatpush1.bf16.msra.mxu0 0
    %115 = vmatprep.subr.bf16.mxu0 0
    %116 = vmatpush1.bf16.msra.mxu0 0
    %117 = vmatprep.subr.bf16.mxu0 0
    %118 = vmatpush1.bf16.msra.mxu0 0
    %119 = vmatprep.subr.bf16.mxu0 0
    %120 = vmatpush1.bf16.msra.mxu0 0
    %121 = vmatprep.mubr.bf16.mxu0 0
    %122 = vmatmul.mubr.bf16.gmra.mrb[0].mxu0 %v87
    %v123 = vpop.f32.mrb[0].mxu0
    %v124 = vadd.f32 %v71, %v123
    %v125 = vpop.f32.mrb[0].mxu0
    %v126 = vpop.f32.mrb[0].mxu0
    %v127 = vpop.f32.mrb[0].mxu0
    %128 = vdwg.mxu0
    %vm129 = vcmask 1048064
    %v130 = vsel %vm129, %v124, -inf
    %131 = vmax.xlane.f32.xlu0 %v130
    %v132 = vpop.xlane.xlu0 %131
    %v133 = vsub.f32 %v124, %v132
    %v134 = vmul.f32 %v133, 1.442695
    %v135 = vpow.pop %v134
    %137 = vrot.lane.b32.xlu0 %v135, 64
    %v138 = vpop.permute.xlu0 %137
    %vm140 = vcmask 523264
    %v141 = vsel %vm140, %v138, 0.0
    %142 = vadd.xlane.f32.xlu0 %v141
    %v143 = vpop.xlane.xlu0 %142
    %v144 = vrcp.pop %v143
    %v145 = vmul.f32 %v135, %v144
    %147 = vrot.lane.b32.xlu0 %v145, 64
    %v148 = vpop.permute.xlu0 %147
    %v150 = vmul.f32 %v124, %v148
    %v151 = vpack.c.bf16 %v150, %v150
    %v152 = vld [vmem:[%s3] sm:$0xf]
    %v153 = vld [vmem:[%s3 + $0x4] sm:$0xf]
    %v154 = vld [vmem:[%s3 + $0x8] sm:$0xf]
    %v155 = vld [vmem:[%s3 + $0xc] sm:$0xf]
    %v156 = vld [vmem:[%s3 + $0x10] sm:$0xf]
    %v157 = vld [vmem:[%s3 + $0x14] sm:$0xf]
    %v158 = vld [vmem:[%s3 + $0x18] sm:$0xf]
    %v159 = vld [vmem:[%s3 + $0x1c] sm:$0xf]
    %v160 = vld [vmem:[%s4] sm:$0x1]
    %v162 = vlaneseq
    %v163 = vshrl.u32 %v162, 7
    %v164 = vsub.s32 0, %v163
    %v165 = vrot.slane %v160, %v164
    %v175 = vunpack.c.l.b16 %v152
    %v176 = vunpack.c.l.b16 %v153
    %v177 = vunpack.c.l.b16 %v154
    %v178 = vunpack.c.l.b16 %v155
    %v179 = vunpack.c.l.b16 %v156
    %v180 = vunpack.c.l.b16 %v157
    %v181 = vunpack.c.l.b16 %v158
    %v182 = vunpack.c.l.b16 %v159
    %v183 = vpack.c.b16 %v176, %v175
    %v184 = vpack.c.b16 %v178, %v177
    %v185 = vpack.c.b16 %v180, %v179
    %v186 = vpack.c.b16 %v182, %v181
    %v192 = vsel %vm140, %v151, 0
    %194 = vmatprep.subr.bf16.mxu0 0
    %195 = vmatpush1.bf16.msra.mxu0 %v183
    %196 = vmatprep.subr.bf16.mxu0 0
    %197 = vmatpush1.bf16.msra.mxu0 %v184
    %198 = vmatprep.subr.bf16.mxu0 0
    %199 = vmatpush1.bf16.msra.mxu0 %v185
    %200 = vmatprep.subr.bf16.mxu0 0
    %201 = vmatpush1.bf16.msra.mxu0 %v186
    %202 = vmatprep.subr.bf16.mxu0 0
    %203 = vmatpush1.bf16.msra.mxu0 0
    %204 = vmatprep.subr.bf16.mxu0 0
    %205 = vmatpush1.bf16.msra.mxu0 0
    %206 = vmatprep.subr.bf16.mxu0 0
    %207 = vmatpush1.bf16.msra.mxu0 0
    %208 = vmatprep.subr.bf16.mxu0 0
    %209 = vmatpush1.bf16.msra.mxu0 0
    %210 = vmatprep.subr.bf16.mxu0 0
    %211 = vmatpush1.bf16.msra.mxu0 0
    %212 = vmatprep.subr.bf16.mxu0 0
    %213 = vmatpush1.bf16.msra.mxu0 0
    %214 = vmatprep.subr.bf16.mxu0 0
    %215 = vmatpush1.bf16.msra.mxu0 0
    %216 = vmatprep.subr.bf16.mxu0 0
    %217 = vmatpush1.bf16.msra.mxu0 0
    %218 = vmatprep.subr.bf16.mxu0 0
    %219 = vmatpush1.bf16.msra.mxu0 0
    %220 = vmatprep.subr.bf16.mxu0 0
    %221 = vmatpush1.bf16.msra.mxu0 0
    %222 = vmatprep.subr.bf16.mxu0 0
    %223 = vmatpush1.bf16.msra.mxu0 0
    %224 = vmatprep.subr.bf16.mxu0 0
    %225 = vmatpush1.bf16.msra.mxu0 0
    %226 = vmatprep.mubr.bf16.mxu0 0
    %227 = vmatmul.mubr.bf16.gmra.mrb[0].mxu0 %v192
    %v228 = vpop.f32.mrb[0].mxu0
    %v229 = vadd.f32 %v165, %v228
    %v230 = vpop.f32.mrb[0].mxu0
    %v231 = vpop.f32.mrb[0].mxu0
    %v232 = vpop.f32.mrb[0].mxu0
    %233 = vdwg.mxu0
    %v234 = vmax.f32 %v229, 0.0
    %v235 = vpack.c.bf16 %v234, %v234
    %v236 = vld [vmem:[#allocation5] sm:$0xf]
    %v237 = vld [vmem:[#allocation5 + $0x4] sm:$0xf]
    %v238 = vld [vmem:[#allocation5 + $0x8] sm:$0xf]
    %v239 = vld [vmem:[#allocation5 + $0xc] sm:$0xf]
    %v240 = vld [vmem:[#allocation5 + $0x10] sm:$0xf]
    %v241 = vld [vmem:[#allocation5 + $0x14] sm:$0xf]
    %v242 = vld [vmem:[#allocation5 + $0x18] sm:$0xf]
    %v243 = vld [vmem:[#allocation5 + $0x1c] sm:$0xf]
    %v244 = vld [vmem:[%s6] sm:$0x1]
    %v246 = vlaneseq
    %v247 = vshrl.u32 %v246, 7
    %v248 = vsub.s32 0, %v247
    %v249 = vrot.slane %v244, %v248
    %v259 = vunpack.c.l.b16 %v236
    %v260 = vunpack.c.l.b16 %v237
    %v261 = vunpack.c.l.b16 %v238
    %v262 = vunpack.c.l.b16 %v239
    %v263 = vunpack.c.l.b16 %v240
    %v264 = vunpack.c.l.b16 %v241
    %v265 = vunpack.c.l.b16 %v242
    %v266 = vunpack.c.l.b16 %v243
    %v267 = vpack.c.b16 %v260, %v259
    %v268 = vpack.c.b16 %v262, %v261
    %v269 = vpack.c.b16 %v264, %v263
    %v270 = vpack.c.b16 %v266, %v265
    %v276 = vsel %vm140, %v235, 0
    %278 = vmatprep.subr.bf16.mxu0 0
    %279 = vmatpush1.bf16.msra.mxu0 %v267
    %280 = vmatprep.subr.bf16.mxu0 0
    %281 = vmatpush1.bf16.msra.mxu0 %v268
    %282 = vmatprep.subr.bf16.mxu0 0
    %283 = vmatpush1.bf16.msra.mxu0 %v269
    %284 = vmatprep.subr.bf16.mxu0 0
    %285 = vmatpush1.bf16.msra.mxu0 %v270
    %286 = vmatprep.subr.bf16.mxu0 0
    %287 = vmatpush1.bf16.msra.mxu0 0
    %288 = vmatprep.subr.bf16.mxu0 0
    %289 = vmatpush1.bf16.msra.mxu0 0
    %290 = vmatprep.subr.bf16.mxu0 0
    %291 = vmatpush1.bf16.msra.mxu0 0
    %292 = vmatprep.subr.bf16.mxu0 0
    %293 = vmatpush1.bf16.msra.mxu0 0
    %294 = vmatprep.subr.bf16.mxu0 0
    %295 = vmatpush1.bf16.msra.mxu0 0
    %296 = vmatprep.subr.bf16.mxu0 0
    %297 = vmatpush1.bf16.msra.mxu0 0
    %298 = vmatprep.subr.bf16.mxu0 0
    %299 = vmatpush1.bf16.msra.mxu0 0
    %300 = vmatprep.subr.bf16.mxu0 0
    %301 = vmatpush1.bf16.msra.mxu0 0
    %302 = vmatprep.subr.bf16.mxu0 0
    %303 = vmatpush1.bf16.msra.mxu0 0
    %304 = vmatprep.subr.bf16.mxu0 0
    %305 = vmatpush1.bf16.msra.mxu0 0
    %306 = vmatprep.subr.bf16.mxu0 0
    %307 = vmatpush1.bf16.msra.mxu0 0
    %308 = vmatprep.subr.bf16.mxu0 0
    %309 = vmatpush1.bf16.msra.mxu0 0
    %310 = vmatprep.mubr.bf16.mxu0 0
    %311 = vmatmul.mubr.bf16.gmra.mrb[0].mxu0 %v276
    %v312 = vpop.f32.mrb[0].mxu0
    %v313 = vadd.f32 %v249, %v312
    %v314 = vpop.f32.mrb[0].mxu0
    %v315 = vpop.f32.mrb[0].mxu0
    %v316 = vpop.f32.mrb[0].mxu0
    %317 = vdwg.mxu0
    %v318 = vmax.f32 %v313, 0.0
    %v319 = vpack.c.bf16 %v318, %v318
    %v320 = vld [vmem:[%s7] sm:$0xf]
    %v321 = vld [vmem:[%s7 + $0x4] sm:$0xf]
    %v322 = vld [vmem:[%s7 + $0x8] sm:$0xf]
    %v323 = vld [vmem:[%s7 + $0xc] sm:$0xf]
    %v324 = vld [vmem:[%s7 + $0x10] sm:$0xf]
    %v325 = vld [vmem:[%s7 + $0x14] sm:$0xf]
    %v326 = vld [vmem:[%s7 + $0x18] sm:$0xf]
    %v327 = vld [vmem:[%s7 + $0x1c] sm:$0xf]
    %v328 = vld [vmem:[%s8] sm:$0x1]
    %v330 = vlaneseq
    %v331 = vshrl.u32 %v330, 7
    %v332 = vsub.s32 0, %v331
    %v333 = vrot.slane %v328, %v332
    %v343 = vunpack.c.l.b16 %v320
    %v344 = vunpack.c.l.b16 %v321
    %v345 = vunpack.c.l.b16 %v322
    %v346 = vunpack.c.l.b16 %v323
    %v347 = vunpack.c.l.b16 %v324
    %v348 = vunpack.c.l.b16 %v325
    %v349 = vunpack.c.l.b16 %v326
    %v350 = vunpack.c.l.b16 %v327
    %v351 = vpack.c.b16 %v344, %v343
    %v352 = vpack.c.b16 %v346, %v345
    %v353 = vpack.c.b16 %v348, %v347
    %v354 = vpack.c.b16 %v350, %v349
    %v360 = vsel %vm140, %v319, 0
    %362 = vmatprep.subr.bf16.mxu0 0
    %363 = vmatpush1.bf16.msra.mxu0 %v351
    %364 = vmatprep.subr.bf16.mxu0 0
    %365 = vmatpush1.bf16.msra.mxu0 %v352
    %366 = vmatprep.subr.bf16.mxu0 0
    %367 = vmatpush1.bf16.msra.mxu0 %v353
    %368 = vmatprep.subr.bf16.mxu0 0
    %369 = vmatpush1.bf16.msra.mxu0 %v354
    %370 = vmatprep.subr.bf16.mxu0 0
    %371 = vmatpush1.bf16.msra.mxu0 0
    %372 = vmatprep.subr.bf16.mxu0 0
    %373 = vmatpush1.bf16.msra.mxu0 0
    %374 = vmatprep.subr.bf16.mxu0 0
    %375 = vmatpush1.bf16.msra.mxu0 0
    %376 = vmatprep.subr.bf16.mxu0 0
    %377 = vmatpush1.bf16.msra.mxu0 0
    %378 = vmatprep.subr.bf16.mxu0 0
    %379 = vmatpush1.bf16.msra.mxu0 0
    %380 = vmatprep.subr.bf16.mxu0 0
    %381 = vmatpush1.bf16.msra.mxu0 0
    %382 = vmatprep.subr.bf16.mxu0 0
    %383 = vmatpush1.bf16.msra.mxu0 0
    %384 = vmatprep.subr.bf16.mxu0 0
    %385 = vmatpush1.bf16.msra.mxu0 0
    %386 = vmatprep.subr.bf16.mxu0 0
    %387 = vmatpush1.bf16.msra.mxu0 0
    %388 = vmatprep.subr.bf16.mxu0 0
    %389 = vmatpush1.bf16.msra.mxu0 0
    %390 = vmatprep.subr.bf16.mxu0 0
    %391 = vmatpush1.bf16.msra.mxu0 0
    %392 = vmatprep.subr.bf16.mxu0 0
    %393 = vmatpush1.bf16.msra.mxu0 0
    %394 = vmatprep.mubr.bf16.mxu0 0
    %395 = vmatmul.mubr.bf16.gmra.mrb[0].mxu0 %v360
    %v396 = vpop.f32.mrb[0].mxu0
    %v397 = vadd.f32 %v333, %v396
    %v398 = vpop.f32.mrb[0].mxu0
    %v399 = vpop.f32.mrb[0].mxu0
    %v400 = vpop.f32.mrb[0].mxu0
    %401 = vdwg.mxu0
    %vm402 = vcmask 64512
    %403 = vst.msk [vmem:[#allocation7] sm:$0xff] %vm402, %v397
    // Predicated region
    $region46: #{feed_forward_nn.1} parent=1 // pred_check
      _
    $region47: #{feed_forward_nn.1} parent=1 // pred_check_branch
      %405 = sbr.rel (0) target = $region49
    $region48: #{feed_forward_nn.1} parent=1 // pred_region
      %s407 = ssub.s32 128, 128
      %408 = vsyncadd [#allocation4], %s407
      %s410 = sshll.u32 [#allocation7], 4
      %s411 = int_to_ptr.vmem [resolvable:$true] %s410
      %413 = dma.vmem_to_hbm [thread:$0]  %s411, 128, %s9, [#allocation4]
    $region49: #{feed_forward_nn.1} parent=1 // pred_fallthru
      _
    // Predicated region
    $region50: #{feed_forward_nn.1} parent=1 // pred_check
      _
    $region51: #{feed_forward_nn.1} parent=1 // pred_check_branch
      %415 = sbr.rel (0) target = $region53
    $region52: #{feed_forward_nn.1} parent=1 // pred_region
      %416 = dma.done [#allocation4], 128
    $region53: #{feed_forward_nn.1} parent=1 // pred_fallthru
      _
    %417 = vsyncpa [#allocation3], 1
    %418 = vsyncpa [#allocation6], 1
    %419 = vsyncpa [#allocation4], 1

</llo_original>
